<compile_context>
chip_gen: v7x
topology: tpu7x:2x2x1
jax: 0.10.0
libtpu: 0.0.40
codegen_flags: <defaults>
</compile_context>

<pallas_src>
import functools

import jax
import jax.numpy as jnp
from jax.experimental import pallas as pl
from jax.experimental.pallas import tpu as pltpu


def _poly_kernel(p_ref, w123_ref, w4_ref, o_ref):
    # p_ref:    (CK+1, tm)     patch tile for one batch image, last row = ones
    # w123_ref: (3*Cg, CK+1)   fused [W1;W2;W3 | b1;b2;b3+b4], Cg = roundup(Cout, 8)
    # w4_ref:   (Cout, Cg)     1x1 conv weight (zero-padded columns)
    # o_ref:    (Cout, tm)
    cout = o_ref.shape[0]
    cg = w4_ref.shape[1]
    y = jnp.dot(w123_ref[...], p_ref[...],
                preferred_element_type=jnp.float32)            # (3*Cg, tm)
    x1 = y[0 * cg:1 * cg, :]
    x2 = y[1 * cg:2 * cg, :]
    x3 = y[2 * cg:2 * cg + cout, :]
    out = jnp.dot(w4_ref[...], x1 * x2,
                  preferred_element_type=jnp.float32) + x3     # (Cout, tm)
    o_ref[...] = out.astype(o_ref.dtype)


def polynomial_regression_pallas(x, params, kernel_size, tm=4096):
    """x: (N, C_in, H, W) float32, NCHW.  Returns (N, C_out, H, W-K+1)."""
    w1, b1, w2, b2, w3, b3, w4, b4 = params
    N, Cin, H, W = x.shape
    K = kernel_size
    Wout = W - K + 1
    Cout = w1.shape[0]
    CK = Cin * K
    CKp1 = CK + 1
    HWout = H * Wout

    # ---- glue: N-major lane-dense im2col (stack + reshape, no transpose).
    # patches[n, ci*K + k, h*Wout + w] = x[n, ci, h, w + k]
    slices = [x[:, :, :, k:k + Wout] for k in range(K)]        # (N,Cin,H,Wout) each
    patches = jnp.stack(slices, axis=2).reshape(N, CK, HWout)  # (N, CK, HWout)
    patches_aug = jnp.concatenate(
        [patches, jnp.ones((N, 1, HWout), x.dtype)], axis=1)   # (N, CK+1, HWout)

    # ---- fused weights: rows [W1; W2; W3] (each group padded to Cg rows),
    # last column = biases; b4 folded into the W3 group's bias.
    Cg = 8 * pl.cdiv(Cout, 8)
    w123_aug = jnp.zeros((3 * Cg, CKp1), jnp.float32)
    for i, (w, b) in enumerate(((w1, b1), (w2, b2), (w3, b3 + b4))):
        blk = jnp.concatenate([w.reshape(Cout, CK).astype(jnp.float32),
                               b.reshape(Cout, 1).astype(jnp.float32)], axis=1)
        w123_aug = w123_aug.at[i * Cg:i * Cg + Cout, :].set(blk)
    w4g = jnp.zeros((Cout, Cg), jnp.float32).at[:, :Cout].set(
        w4.reshape(Cout, Cout).astype(jnp.float32))

    # ---- tiling: lane dim = HWout; tm multiple of 128; ragged tail masked.
    tm_eff = min(tm, 128 * pl.cdiv(HWout, 128))
    grid = (N, pl.cdiv(HWout, tm_eff))
    const = lambda n, j: (0, 0)

    out = pl.pallas_call(
        _poly_kernel,
        out_shape=jax.ShapeDtypeStruct((N, Cout, HWout), jnp.float32),
        grid_spec=pltpu.PrefetchScalarGridSpec(
            num_scalar_prefetch=0,
            grid=grid,
            in_specs=[
                pl.BlockSpec((None, CKp1, tm_eff), lambda n, j: (n, 0, j)),
                pl.BlockSpec((3 * Cg, CKp1), const),
                pl.BlockSpec((Cout, Cg), const),
            ],
            out_specs=pl.BlockSpec((None, Cout, tm_eff), lambda n, j: (n, 0, j)),
        ),
        compiler_params=pltpu.CompilerParams(
            dimension_semantics=("parallel", "parallel")),
    )(patches_aug, w123_aug, w4g)

    # free reshape (no transpose): (N, Cout, H*Wout) -> (N, Cout, H, Wout)
    return out.reshape(N, Cout, H, Wout)


# ---------- pure-JAX reference (correctness check only) ----------
def _ref_conv(x, w, b):
    y = jax.lax.conv_general_dilated(
        x, w, window_strides=(1, 1), padding="VALID",
        dimension_numbers=("NCHW", "OIHW", "NCHW"))
    return y + b[None, :, None, None]


def polynomial_regression_ref(x, params):
    w1, b1, w2, b2, w3, b3, w4, b4 = params
    x1 = _ref_conv(x, w1, b1)
    x2 = _ref_conv(x, w2, b2)
    x3 = _ref_conv(x, w3, b3)
    return _ref_conv(x1 * x2, w4, b4) + x3


if __name__ == "__main__":
    # Small shapes consistent with the module.
    N, Cin, Cout, H, W, K = 2, 4, 8, 16, 16, 3

    key = jax.random.PRNGKey(0)
    kx, k1, k2, k3, k4, kb1, kb2, kb3, kb4 = jax.random.split(key, 9)

    x = jax.random.normal(kx, (N, Cin, H, W), dtype=jnp.float32)

    s = 1.0 / jnp.sqrt(Cin * K)
    s4 = 1.0 / jnp.sqrt(Cout)
    params = (
        jax.random.uniform(k1, (Cout, Cin, 1, K), jnp.float32, -s, s),
        jax.random.uniform(kb1, (Cout,), jnp.float32, -s, s),
        jax.random.uniform(k2, (Cout, Cin, 1, K), jnp.float32, -s, s),
        jax.random.uniform(kb2, (Cout,), jnp.float32, -s, s),
        jax.random.uniform(k3, (Cout, Cin, 1, K), jnp.float32, -s, s),
        jax.random.uniform(kb3, (Cout,), jnp.float32, -s, s),
        jax.random.uniform(k4, (Cout, Cout, 1, 1), jnp.float32, -s4, s4),
        jax.random.uniform(kb4, (Cout,), jnp.float32, -s4, s4),
    )

    fn = jax.jit(functools.partial(polynomial_regression_pallas, kernel_size=K))
    y = fn(x, params)
    y = jax.block_until_ready(y)

    y_ref = polynomial_regression_ref(x, params)
    assert y.shape == (N, Cout, H, W - K + 1), y.shape
    assert jnp.allclose(y, y_ref, atol=1e-4, rtol=1e-4), "mismatch vs reference"

    print("KERNEL_OK")
</pallas_src>

<mosaic_0001>
module attributes {stable_mosaic.version = 11 : i64} {
  func.func @_poly_kernel(%arg0: i32, %arg1: i32, %arg2: memref<1x13x256xf32, #tpu.memory_space<vmem>>, %arg3: memref<24x13xf32, #tpu.memory_space<vmem>>, %arg4: memref<8x8xf32, #tpu.memory_space<vmem>>, %arg5: memref<1x8x256xf32, #tpu.memory_space<vmem>>) attributes {dimension_semantics = [#tpu.dimension_semantics<parallel>, #tpu.dimension_semantics<parallel>], iteration_bounds = array<i64: 2, 1>, scalar_prefetch = 0 : i64, scratch_operands = 0 : i64, tpu.core_type = #tpu.core_type<tc>, window_params = [{transform_indices = @transform_0, window_bounds = array<i64: 1, 13, 256>}, {pipeline_mode = #tpu.pipeline_mode<synchronous>, transform_indices = @transform_1, window_bounds = array<i64: 24, 13>}, {pipeline_mode = #tpu.pipeline_mode<synchronous>, transform_indices = @transform_2, window_bounds = array<i64: 8, 8>}, {transform_indices = @transform_3, window_bounds = array<i64: 1, 8, 256>}]} {
    %c0 = arith.constant 0 : index
    %c0_0 = arith.constant 0 : index
    %0 = vector.load %arg3[%c0, %c0_0] : memref<24x13xf32, #tpu.memory_space<vmem>>, vector<24x13xf32>
    %c0_1 = arith.constant 0 : index
    %c0_2 = arith.constant 0 : index
    %c0_3 = arith.constant 0 : index
    %1 = vector.load %arg2[%c0_1, %c0_2, %c0_3] : memref<1x13x256xf32, #tpu.memory_space<vmem>>, vector<1x13x256xf32>
    %2 = vector.shape_cast %1 : vector<1x13x256xf32> to vector<13x256xf32>
    %cst = arith.constant dense<0.000000e+00> : vector<24x256xf32>
    %3 = tpu.matmul %0, %2, %cst {dimension_numbers = #tpu.dot_dimension_numbers<[1], [0], [0], [1], [0, 0, 1, 1], [], []>} : vector<24x13xf32>, vector<13x256xf32>, vector<24x256xf32> -> vector<24x256xf32>
    %4 = vector.extract_strided_slice %3 {offsets = [0, 0], sizes = [8, 256], strides = [1, 1]} : vector<24x256xf32> to vector<8x256xf32>
    %5 = vector.extract_strided_slice %3 {offsets = [8, 0], sizes = [8, 256], strides = [1, 1]} : vector<24x256xf32> to vector<8x256xf32>
    %6 = vector.extract_strided_slice %3 {offsets = [16, 0], sizes = [8, 256], strides = [1, 1]} : vector<24x256xf32> to vector<8x256xf32>
    %c0_4 = arith.constant 0 : index
    %c0_5 = arith.constant 0 : index
    %7 = vector.load %arg4[%c0_4, %c0_5] : memref<8x8xf32, #tpu.memory_space<vmem>>, vector<8x8xf32>
    %8 = arith.mulf %4, %5 : vector<8x256xf32>
    %cst_6 = arith.constant dense<0.000000e+00> : vector<8x256xf32>
    %9 = tpu.matmul %7, %8, %cst_6 {dimension_numbers = #tpu.dot_dimension_numbers<[1], [0], [0], [1], [0, 0, 1, 1], [], []>} : vector<8x8xf32>, vector<8x256xf32>, vector<8x256xf32> -> vector<8x256xf32>
    %10 = arith.addf %9, %6 : vector<8x256xf32>
    %c0_7 = arith.constant 0 : index
    %c0_8 = arith.constant 0 : index
    %c0_9 = arith.constant 0 : index
    %11 = vector.load %arg5[%c0_7, %c0_8, %c0_9] : memref<1x8x256xf32, #tpu.memory_space<vmem>>, vector<1x8x256xf32>
    %12 = vector.shape_cast %11 : vector<1x8x256xf32> to vector<8x256xf32>
    %13 = vector.shape_cast %10 : vector<8x256xf32> to vector<1x8x256xf32>
    tpu.vector_store %arg5[%c0_7, %c0_8, %c0_9], %13 {strides = array<i32>} : memref<1x8x256xf32, #tpu.memory_space<vmem>>, vector<1x8x256xf32>,
    return
  }
  func.func @transform_0(%arg0: i32, %arg1: i32) -> (i32, i32, i32) {
    %c0_i32 = arith.constant 0 : i32
    %c0_i32_0 = arith.constant 0 : i32
    return %arg0, %c0_i32, %arg1 : i32, i32, i32
  }
  func.func @transform_1(%arg0: i32, %arg1: i32) -> (i32, i32) {
    %c0_i32 = arith.constant 0 : i32
    %c0_i32_0 = arith.constant 0 : i32
    %c0_i32_1 = arith.constant 0 : i32
    return %c0_i32, %c0_i32_0 : i32, i32
  }
  func.func @transform_2(%arg0: i32, %arg1: i32) -> (i32, i32) {
    %c0_i32 = arith.constant 0 : i32
    %c0_i32_0 = arith.constant 0 : i32
    %c0_i32_1 = arith.constant 0 : i32
    return %c0_i32, %c0_i32_0 : i32, i32
  }
  func.func @transform_3(%arg0: i32, %arg1: i32) -> (i32, i32, i32) {
    %c0_i32 = arith.constant 0 : i32
    %c0_i32_0 = arith.constant 0 : i32
    return %arg0, %c0_i32, %arg1 : i32, i32, i32
  }
}

</mosaic_0001>

<llo_original>
// kernel: polynomial_regression_pallas.1
$region0: #{polynomial_regression_pallas.1}
  #allocation0 [shape = 'u32[]', space=smem, size = 0x4, offset = 0x4, fixed_abs, tag = 'smem constant byte address 0x4 - core index']
  #allocation1 [shape = 'u32[144,128]{1,0:T(1,128)}', space=vmem, size = 0x12000, scoped, tag = 'internal scratch']
  %s0 = inlined_call_operand.vmem [shape: f32[2,13,224], index: 0, kind: input, shape index: {}]
  %s1 = inlined_call_operand.vmem [shape: f32[24,13], index: 1, kind: input, shape index: {}]
  %s2 = inlined_call_operand.vmem [shape: f32[8,8], index: 2, kind: input, shape index: {}]
  %s3 = inlined_call_operand.vmem [shape: f32[2,8,224], index: 3, kind: output, shape index: {}]
  %s4 = sld [smem:[#allocation0]]
  $region45: #{polynomial_regression_pallas.1} parent=0
    _
  %s6 = ssub.s32 1, %s4
  %s7 = scalar_select 0, %s6, %s4
  loop: start=0, step=1, limit=4
  $region2: #{polynomial_regression_pallas.1} parent=0 // loop_pre_header
    _
  $region3: #{polynomial_regression_pallas.1} parent=0 // loop_header
    %s9 = sphi 0, %s13
    %p10 = scmp.ge.s32.totalorder %s9, 4
    %s16 = sphi 0, %s28
    %s17 = sphi 0, %s24
    %s18 = sphi 0, %s16
    %s19 = sphi 0, %s17
    %s20 = sphi 0, %s18
    %s21 = sphi 0, %s19
    %s33 = sphi 0, %s35
    %s36 = sphi 0, %s33
    %s37 = sphi 0, %s36
    %s53 = sphi 0, %s37
    %s57 = sphi 0, %s57
    %s59 = sphi 0, %s57
    %s60 = sphi 0, %s59
    %s74 = sphi 0, %s60
    %s78 = sphi 0, %s78
    %s80 = sphi 0, %s78
    %s81 = sphi 0, %s80
    %s95 = sphi 0, %s81
    %s103 = sphi 0, %s105
    %s106 = sphi 0, %s103
    %s107 = sphi 0, %s106
    %s123 = sphi 0, %s107
  $region4: #{polynomial_regression_pallas.1} parent=0 // loop_header_branch
    %12 = sbr.rel (%p10) target = $region8
  $region5: #{polynomial_regression_pallas.1} parent=0 // loop_body
    %s14 = ssub.s32 %s9, 1
    %s15 = ssub.s32 %s9, 2
    %s22 = sadd.s32 1, %s17
    %p23 = scmp.ge.s32.totalorder %s22, 1
    %s24 = scalar_select %p23, 0, %s22
    %s25 = sadd.s32 1, %s16
    %s26 = scalar_select %p23, %s25, %s16
    %p27 = scmp.ge.s32.totalorder %s26, 2
    %s28 = scalar_select %p27, 0, %s26
    %s29 = ssub.s32 %s16, %s28
    %s30 = ssub.s32 %s17, %s24
    %s31 = sor.u32 %s29, %s30
    %p32 = scmp.eq.s32.totalorder %s31, 0
    %s34 = sadd.s32 %s33, 1
    %s35 = scalar_select %p32, %s33, %s34
    %p38 = pneg %p32
    %p39 = scmp.eq.s32.totalorder %s9, 1
    %p40 = por %p38, %p39
    %p41 = scmp.ne.s32.totalorder %s33, %s36
    %p42 = scmp.eq.s32.totalorder %s9, 0
    %p43 = por %p41, %p42
    %p44 = scmp.ne.s32.totalorder %s33, %s36
    %p45 = scmp.eq.s32.totalorder %s14, 1
    %p46 = por %p44, %p45
    %p47 = scmp.ne.s32.totalorder %s36, %s37
    %p48 = scmp.eq.s32.totalorder %s14, 0
    %p49 = por %p47, %p48
    %p50 = scmp.ne.s32.totalorder %s36, %s37
    %p51 = scmp.eq.s32.totalorder %s15, 1
    %p52 = por %p50, %p51
    %p54 = scmp.ne.s32.totalorder %s37, %s53
    %p55 = scmp.eq.s32.totalorder %s15, 0
    %p56 = por %p54, %p55
    %s58 = sadd.s32 %s57, 1
    %p61 = scmp.eq.s32.totalorder %s9, 1
    %p62 = scmp.ne.s32.totalorder %s57, %s59
    %p63 = scmp.eq.s32.totalorder %s9, 0
    %p64 = por %p62, %p63
    %p65 = scmp.ne.s32.totalorder %s57, %s59
    %p66 = scmp.eq.s32.totalorder %s14, 1
    %p67 = por %p65, %p66
    %p68 = scmp.ne.s32.totalorder %s59, %s60
    %p69 = scmp.eq.s32.totalorder %s14, 0
    %p70 = por %p68, %p69
    %p71 = scmp.ne.s32.totalorder %s59, %s60
    %p72 = scmp.eq.s32.totalorder %s15, 1
    %p73 = por %p71, %p72
    %p75 = scmp.ne.s32.totalorder %s60, %s74
    %p76 = scmp.eq.s32.totalorder %s15, 0
    %p77 = por %p75, %p76
    %s79 = sadd.s32 %s78, 1
    %p82 = scmp.eq.s32.totalorder %s9, 1
    %p83 = scmp.ne.s32.totalorder %s78, %s80
    %p84 = scmp.eq.s32.totalorder %s9, 0
    %p85 = por %p83, %p84
    %p86 = scmp.ne.s32.totalorder %s78, %s80
    %p87 = scmp.eq.s32.totalorder %s14, 1
    %p88 = por %p86, %p87
    %p89 = scmp.ne.s32.totalorder %s80, %s81
    %p90 = scmp.eq.s32.totalorder %s14, 0
    %p91 = por %p89, %p90
    %p92 = scmp.ne.s32.totalorder %s80, %s81
    %p93 = scmp.eq.s32.totalorder %s15, 1
    %p94 = por %p92, %p93
    %p96 = scmp.ne.s32.totalorder %s81, %s95
    %p97 = scmp.eq.s32.totalorder %s15, 0
    %p98 = por %p96, %p97
    %s99 = ssub.s32 %s16, %s28
    %s100 = ssub.s32 %s17, %s24
    %s101 = sor.u32 %s99, %s100
    %p102 = scmp.eq.s32.totalorder %s101, 0
    %s104 = sadd.s32 %s103, 1
    %s105 = scalar_select %p102, %s103, %s104
    %p108 = pneg %p102
    %p109 = scmp.eq.s32.totalorder %s9, 1
    %p110 = por %p108, %p109
    %p111 = scmp.ne.s32.totalorder %s103, %s106
    %p112 = scmp.eq.s32.totalorder %s9, 0
    %p113 = por %p111, %p112
    %p114 = scmp.ne.s32.totalorder %s103, %s106
    %p115 = scmp.eq.s32.totalorder %s14, 1
    %p116 = por %p114, %p115
    %p117 = scmp.ne.s32.totalorder %s106, %s107
    %p118 = scmp.eq.s32.totalorder %s14, 0
    %p119 = por %p117, %p118
    %p120 = scmp.ne.s32.totalorder %s106, %s107
    %p121 = scmp.eq.s32.totalorder %s15, 1
    %p122 = por %p120, %p121
    %p124 = scmp.ne.s32.totalorder %s107, %s123
    %p125 = scmp.eq.s32.totalorder %s15, 0
    %p126 = por %p124, %p125
    %p127 = scmp.le.s32.totalorder 1, %s9
    %p128 = scmp.lt.s32.totalorder %s9, 3
    %p129 = pnand %p127, %p128
    %p130 = pneg %p129
    // Predicated region
    $region9: #{polynomial_regression_pallas.1} parent=5 // pred_check
      _
    $region10: #{polynomial_regression_pallas.1} parent=5 // pred_check_branch
      %132 = sbr.rel (%p129) target = $region12
    $region11: #{polynomial_regression_pallas.1} parent=5 // pred_region
      %s133 = ssub.s32 %s9, 1
      // Predicated region
      $region13: #{polynomial_regression_pallas.1} parent=11 // pred_check
        %p134 = pneg %p70
      $region14: #{polynomial_regression_pallas.1} parent=11 // pred_check_branch
        %136 = sbr.rel (%p134) target = $region16
      $region15: #{polynomial_regression_pallas.1} parent=11 // pred_region
        _
      $region16: #{polynomial_regression_pallas.1} parent=11 // pred_fallthru
        _
      // Predicated region
      $region17: #{polynomial_regression_pallas.1} parent=11 // pred_check
        %p137 = pneg %p91
      $region18: #{polynomial_regression_pallas.1} parent=11 // pred_check_branch
        %139 = sbr.rel (%p137) target = $region20
      $region19: #{polynomial_regression_pallas.1} parent=11 // pred_region
        _
      $region20: #{polynomial_regression_pallas.1} parent=11 // pred_fallthru
        _
    $region12: #{polynomial_regression_pallas.1} parent=5 // pred_fallthru
      _
    %p140 = scmp.lt.s32.totalorder %s9, 2
    // Predicated region
    $region21: #{polynomial_regression_pallas.1} parent=5 // pred_check
      %p141 = pneg %p140
    $region22: #{polynomial_regression_pallas.1} parent=5 // pred_check_branch
      %143 = sbr.rel (%p141) target = $region24
    $region23: #{polynomial_regression_pallas.1} parent=5 // pred_region
      // Predicated region
      $region25: #{polynomial_regression_pallas.1} parent=23 // pred_check
        %p144 = pneg %p43
      $region26: #{polynomial_regression_pallas.1} parent=23 // pred_check_branch
        %146 = sbr.rel (%p144) target = $region28
      $region27: #{polynomial_regression_pallas.1} parent=23 // pred_region
        %s147 = smul.u32 2, %s17
        %p148 = scmp.lt.s32.totalorder %s16, 1
        %s149 = scalar_select %p148, %s16, 1
        %p150 = scmp.lt.s32.totalorder %s147, 1
        %s151 = scalar_select %p150, %s147, 1
        %s152 = smul.addr %s149, 4
        %s153 = sadd.s32 %s151, %s152
        %s154 = smul.addr %s153, 8
        %s155 = scalar_lea.vmem %s0, %s154
        %s156 = smul.u32 2, %s17
      $region28: #{polynomial_regression_pallas.1} parent=23 // pred_fallthru
        _
    $region24: #{polynomial_regression_pallas.1} parent=5 // pred_fallthru
      _
    %p157 = scmp.le.s32.totalorder 1, %s9
    %p158 = scmp.lt.s32.totalorder %s9, 3
    %p159 = pnand %p157, %p158
    %p160 = pneg %p159
    // Predicated region
    $region29: #{polynomial_regression_pallas.1} parent=5 // pred_check
      _
    $region30: #{polynomial_regression_pallas.1} parent=5 // pred_check_branch
      %162 = sbr.rel (%p159) target = $region32
    $region31: #{polynomial_regression_pallas.1} parent=5 // pred_region
      %s163 = ssub.s32 %s9, 1
      %s164 = smul.u32 2, %s19
      %p165 = scmp.lt.s32.totalorder %s18, 1
      %s166 = scalar_select %p165, %s18, 1
      %p167 = scmp.lt.s32.totalorder %s164, 1
      %s168 = scalar_select %p167, %s164, 1
      %s169 = smul.addr %s166, 4
      %s170 = sadd.s32 %s168, %s169
      %s171 = smul.addr %s170, 8
      %s172 = scalar_lea.vmem %s0, %s171
      %p173 = pneg %p49
      %p174 = pneg %p46
      %p175 = pneg %p70
      %p176 = pneg %p67
      %p177 = pneg %p91
      %p178 = pneg %p88
      %p179 = pneg %p119
      %p180 = pneg %p116
      %s181 = smul.u32 2, %s19
      %p182 = scmp.lt.s32.totalorder %s18, 1
      %s183 = scalar_select %p182, %s18, 1
      %p184 = scmp.lt.s32.totalorder %s181, 1
      %s185 = scalar_select %p184, %s181, 1
      %s186 = smul.addr %s183, 2
      %s187 = sadd.s32 %s185, %s186
      %s188 = smul.addr %s187, 8
      %s189 = scalar_lea.vmem %s3, %s188
      %s190 = smul.u32 2, %s19
      %p191 = scmp.lt.s32.totalorder %s18, 1
      %s192 = scalar_select %p191, %s18, 1
      %p193 = scmp.lt.s32.totalorder %s190, 1
      %s194 = scalar_select %p193, %s190, 1
      %s195 = smul.addr %s192, 4
      %s196 = sadd.s32 %s194, %s195
      %s197 = smul.addr %s196, 8
      %s198 = scalar_lea.vmem %s0, %s197
      %s199 = smul.u32 2, %s19
      %s200 = smul.u32 2, %s19
      %p201 = scmp.lt.s32.totalorder %s18, 1
      %s202 = scalar_select %p201, %s18, 1
      %p203 = scmp.lt.s32.totalorder %s200, 1
      %s204 = scalar_select %p203, %s200, 1
      %s205 = smul.addr %s202, 2
      %s206 = sadd.s32 %s204, %s205
      %s207 = smul.addr %s206, 8
      %s208 = scalar_lea.vmem %s3, %s207
      %s209 = smul.u32 2, %s19
      %v210 = vld [vmem:[%s1] sm:$0xff]
      %v211 = vld [vmem:[%s1 + $0x8] sm:$0xff]
      %v212 = vld [vmem:[%s1 + $0x10] sm:$0xff]
      %v213 = vld [vmem:[%s198] sm:$0xff]
      %v214 = vld [vmem:[%s198 + $0x8] sm:$0xff]
      %v215 = vld [vmem:[%s198 + $0x10] sm:$0x1f]
      %v216 = vld [vmem:[%s198 + $0x18] sm:$0x1f]
      %vm217 = vcmask 105472
      %v219 = vsel %vm217, %v210, 0
      %v222 = vsel %vm217, %v211, 0
      %v225 = vsel %vm217, %v212, 0
      %vm227 = vcmask 1044480
      %v229 = vsel %vm227, %v215, 0
      %v232 = vsel %vm227, %v216, 0
      %234 = vmatprep.subr.mxu0 %v214
      %235 = vmatpush1.msra.mxu0 %v213
      %236 = vmatprep.subr.mxu0 %v232
      %237 = vmatpush1.msra.mxu0 %v229
      %238 = vmatprep.subr.mxu0 0.0
      %239 = vmatpush1.msra.mxu0 0.0
      %240 = vmatprep.subr.mxu0 0.0
      %241 = vmatpush1.msra.mxu0 0.0
      %242 = vmatprep.subr.mxu0 0.0
      %243 = vmatpush1.msra.mxu0 0.0
      %244 = vmatprep.subr.mxu0 0.0
      %245 = vmatpush1.msra.mxu0 0.0
      %246 = vmatprep.subr.mxu0 0.0
      %247 = vmatpush1.msra.mxu0 0.0
      %248 = vmatprep.subr.mxu0 0.0
      %249 = vmatpush1.msra.mxu0 0.0
      %250 = vmatprep.subr.mxu0 0.0
      %251 = vmatpush1.msra.mxu0 0.0
      %252 = vmatprep.subr.mxu0 0.0
      %253 = vmatpush1.msra.mxu0 0.0
      %254 = vmatprep.subr.mxu0 0.0
      %255 = vmatpush1.msra.mxu0 0.0
      %256 = vmatprep.subr.mxu0 0.0
      %257 = vmatpush1.msra.mxu0 0.0
      %258 = vmatprep.subr.mxu0 0.0
      %259 = vmatpush1.msra.mxu0 0.0
      %260 = vmatprep.subr.mxu0 0.0
      %261 = vmatpush1.msra.mxu0 0.0
      %262 = vmatprep.subr.mxu0 0.0
      %263 = vmatpush1.msra.mxu0 0.0
      %264 = vmatprep.subr.mxu0 0.0
      %265 = vmatpush1.msra.mxu0 0.0
      %266 = vmatprep.subr.mxu0 0.0
      %267 = vmatpush1.msra.mxu0 0.0
      %268 = vmatprep.subr.mxu0 0.0
      %269 = vmatpush1.msra.mxu0 0.0
      %270 = vmatprep.subr.mxu0 0.0
      %271 = vmatpush1.msra.mxu0 0.0
      %272 = vmatprep.subr.mxu0 0.0
      %273 = vmatpush1.msra.mxu0 0.0
      %274 = vmatprep.subr.mxu0 0.0
      %275 = vmatpush1.msra.mxu0 0.0
      %276 = vmatprep.subr.mxu0 0.0
      %277 = vmatpush1.msra.mxu0 0.0
      %278 = vmatprep.subr.mxu0 0.0
      %279 = vmatpush1.msra.mxu0 0.0
      %280 = vmatprep.subr.mxu0 0.0
      %281 = vmatpush1.msra.mxu0 0.0
      %282 = vmatprep.subr.mxu0 0.0
      %283 = vmatpush1.msra.mxu0 0.0
      %284 = vmatprep.subr.mxu0 0.0
      %285 = vmatpush1.msra.mxu0 0.0
      %286 = vmatprep.subr.mxu0 0.0
      %287 = vmatpush1.msra.mxu0 0.0
      %288 = vmatprep.subr.mxu0 0.0
      %289 = vmatpush1.msra.mxu0 0.0
      %290 = vmatprep.subr.mxu0 0.0
      %291 = vmatpush1.msra.mxu0 0.0
      %292 = vmatprep.subr.mxu0 0.0
      %293 = vmatpush1.msra.mxu0 0.0
      %294 = vmatprep.subr.mxu0 0.0
      %295 = vmatpush1.msra.mxu0 0.0
      %296 = vmatprep.subr.mxu0 0.0
      %297 = vmatpush1.msra.mxu0 0.0
      %298 = vmatprep.mubr.f32.mxu0 0.0
      %299 = vmatmul.mubr.f32.gmra.mrb[0].mxu0 %v219
      %v300 = vpop.f32.mrb[0].mxu0
      %v301 = vadd.f32 0.0, %v300
      %v302 = vpop.f32.mrb[0].mxu0
      %v303 = vadd.f32 0.0, %v302
      %304 = vmatprep.mubr.f32.mxu0 0.0
      %305 = vmatmul.mubr.f32.gmra.mrb[0].mxu0 %v222
      %v306 = vpop.f32.mrb[0].mxu0
      %v307 = vadd.f32 0.0, %v306
      %v308 = vpop.f32.mrb[0].mxu0
      %v309 = vadd.f32 0.0, %v308
      %310 = vmatprep.mubr.f32.mxu0 0.0
      %311 = vmatmul.mubr.f32.gmra.mrb[0].mxu0 %v225
      %v312 = vpop.f32.mrb[0].mxu0
      %v313 = vadd.f32 0.0, %v312
      %v314 = vpop.f32.mrb[0].mxu0
      %v315 = vadd.f32 0.0, %v314
      %316 = vdwg.mxu0
      %v317 = vld [vmem:[%s2] sm:$0xff]
      %v318 = vmul.f32 %v301, %v307
      %v319 = vmul.f32 %v303, %v309
      %vm320 = vcmask 64512
      %v322 = vsel %vm320, %v317, 0
      %324 = vmatprep.subr.mxu0 %v319
      %325 = vmatpush1.msra.mxu0 %v318
      %326 = vmatprep.subr.mxu0 0.0
      %327 = vmatpush1.msra.mxu0 0.0
      %328 = vmatprep.subr.mxu0 0.0
      %329 = vmatpush1.msra.mxu0 0.0
      %330 = vmatprep.subr.mxu0 0.0
      %331 = vmatpush1.msra.mxu0 0.0
      %332 = vmatprep.subr.mxu0 0.0
      %333 = vmatpush1.msra.mxu0 0.0
      %334 = vmatprep.subr.mxu0 0.0
      %335 = vmatpush1.msra.mxu0 0.0
      %336 = vmatprep.subr.mxu0 0.0
      %337 = vmatpush1.msra.mxu0 0.0
      %338 = vmatprep.subr.mxu0 0.0
      %339 = vmatpush1.msra.mxu0 0.0
      %340 = vmatprep.subr.mxu0 0.0
      %341 = vmatpush1.msra.mxu0 0.0
      %342 = vmatprep.subr.mxu0 0.0
      %343 = vmatpush1.msra.mxu0 0.0
      %344 = vmatprep.subr.mxu0 0.0
      %345 = vmatpush1.msra.mxu0 0.0
      %346 = vmatprep.subr.mxu0 0.0
      %347 = vmatpush1.msra.mxu0 0.0
      %348 = vmatprep.subr.mxu0 0.0
      %349 = vmatpush1.msra.mxu0 0.0
      %350 = vmatprep.subr.mxu0 0.0
      %351 = vmatpush1.msra.mxu0 0.0
      %352 = vmatprep.subr.mxu0 0.0
      %353 = vmatpush1.msra.mxu0 0.0
      %354 = vmatprep.subr.mxu0 0.0
      %355 = vmatpush1.msra.mxu0 0.0
      %356 = vmatprep.subr.mxu0 0.0
      %357 = vmatpush1.msra.mxu0 0.0
      %358 = vmatprep.subr.mxu0 0.0
      %359 = vmatpush1.msra.mxu0 0.0
      %360 = vmatprep.subr.mxu0 0.0
      %361 = vmatpush1.msra.mxu0 0.0
      %362 = vmatprep.subr.mxu0 0.0
      %363 = vmatpush1.msra.mxu0 0.0
      %364 = vmatprep.subr.mxu0 0.0
      %365 = vmatpush1.msra.mxu0 0.0
      %366 = vmatprep.subr.mxu0 0.0
      %367 = vmatpush1.msra.mxu0 0.0
      %368 = vmatprep.subr.mxu0 0.0
      %369 = vmatpush1.msra.mxu0 0.0
      %370 = vmatprep.subr.mxu0 0.0
      %371 = vmatpush1.msra.mxu0 0.0
      %372 = vmatprep.subr.mxu0 0.0
      %373 = vmatpush1.msra.mxu0 0.0
      %374 = vmatprep.subr.mxu0 0.0
      %375 = vmatpush1.msra.mxu0 0.0
      %376 = vmatprep.subr.mxu0 0.0
      %377 = vmatpush1.msra.mxu0 0.0
      %378 = vmatprep.subr.mxu0 0.0
      %379 = vmatpush1.msra.mxu0 0.0
      %380 = vmatprep.subr.mxu0 0.0
      %381 = vmatpush1.msra.mxu0 0.0
      %382 = vmatprep.subr.mxu0 0.0
      %383 = vmatpush1.msra.mxu0 0.0
      %384 = vmatprep.subr.mxu0 0.0
      %385 = vmatpush1.msra.mxu0 0.0
      %386 = vmatprep.subr.mxu0 0.0
      %387 = vmatpush1.msra.mxu0 0.0
      %388 = vmatprep.mubr.f32.mxu0 0.0
      %389 = vmatmul.mubr.f32.gmra.mrb[0].mxu0 %v322
      %v390 = vpop.f32.mrb[0].mxu0
      %v391 = vadd.f32 %v313, %v390
      %v392 = vpop.f32.mrb[0].mxu0
      %v393 = vadd.f32 %v315, %v392
      %394 = vdwg.mxu0
      %395 = vst [vmem:[%s208] sm:$0xff] %v391
      %396 = vst [vmem:[%s208 + $0x8] sm:$0xff] %v393
      %s397 = smul.u32 2, %s19
      %p398 = scmp.lt.s32.totalorder %s18, 1
      %s399 = scalar_select %p398, %s18, 1
      %p400 = scmp.lt.s32.totalorder %s397, 1
      %s401 = scalar_select %p400, %s397, 1
      %s402 = smul.addr %s399, 2
      %s403 = sadd.s32 %s401, %s402
      %s404 = smul.addr %s403, 8
      %s405 = scalar_lea.vmem %s3, %s404
      // Predicated region
      $region33: #{polynomial_regression_pallas.1} parent=31 // pred_check
        %p406 = pneg %p116
      $region34: #{polynomial_regression_pallas.1} parent=31 // pred_check_branch
        %408 = sbr.rel (%p406) target = $region36
      $region35: #{polynomial_regression_pallas.1} parent=31 // pred_region
        %s409 = smul.u32 2, %s19
      $region36: #{polynomial_regression_pallas.1} parent=31 // pred_fallthru
        _
    $region32: #{polynomial_regression_pallas.1} parent=5 // pred_fallthru
      _
    %p410 = scmp.le.s32.totalorder 2, %s9
    // Predicated region
    $region37: #{polynomial_regression_pallas.1} parent=5 // pred_check
      %p411 = pneg %p410
    $region38: #{polynomial_regression_pallas.1} parent=5 // pred_check_branch
      %413 = sbr.rel (%p411) target = $region40
    $region39: #{polynomial_regression_pallas.1} parent=5 // pred_region
      %s414 = ssub.s32 %s9, 2
      // Predicated region
      $region41: #{polynomial_regression_pallas.1} parent=39 // pred_check
        %p415 = pneg %p122
      $region42: #{polynomial_regression_pallas.1} parent=39 // pred_check_branch
        %417 = sbr.rel (%p415) target = $region44
      $region43: #{polynomial_regression_pallas.1} parent=39 // pred_region
        %s418 = smul.u32 2, %s21
        %p419 = scmp.lt.s32.totalorder %s20, 1
        %s420 = scalar_select %p419, %s20, 1
        %p421 = scmp.lt.s32.totalorder %s418, 1
        %s422 = scalar_select %p421, %s418, 1
        %s423 = smul.addr %s420, 2
        %s424 = sadd.s32 %s422, %s423
        %s425 = smul.addr %s424, 8
        %s426 = scalar_lea.vmem %s3, %s425
      $region44: #{polynomial_regression_pallas.1} parent=39 // pred_fallthru
        _
    $region40: #{polynomial_regression_pallas.1} parent=5 // pred_fallthru
      _
  $region6: #{polynomial_regression_pallas.1} parent=0 // loop_footer
    %s13 = sadd.s32 1, %s9
  $region7: #{polynomial_regression_pallas.1} parent=0 // loop_footer_branch
    %8 = sbr.rel target = $region3
  $region8: #{polynomial_regression_pallas.1} parent=0 // loop_exit
    _

</llo_original>
